<compile_context>
chip_gen: v6e
topology: v6e:2x2x1
jax: 0.10.0
libtpu: 0.0.40
codegen_flags: <defaults>
</compile_context>

<pallas_src>
import functools

import jax
import jax.numpy as jnp
from jax.experimental import pallas as pl
from jax.experimental.pallas import tpu as pltpu


def _round_up(x: int, m: int) -> int:
    return ((x + m - 1) // m) * m


def _mlp_layer_kernel(x_ref, w_ref, b_ref, o_ref, h_ref, *, n_layer: int):
    """One (batch_block, layer) grid step of the fused MLP.

    x_ref: [TB, D_pad]         zero-padded input activations (resident across layers)
    w_ref: [1, D_pad, D_pad]   this layer's zero-padded weight (f32 or bf16), streamed
    b_ref: [1, 1, D_pad]       this layer's zero-padded bias (f32), streamed
    o_ref: [TB, D_pad]         output block (written on the last layer only)
    h_ref: [TB, D_pad] f32     VMEM scratch carrying the running activation
    """
    l = pl.program_id(1)

    @pl.when(l == 0)
    def _():
        h_ref[...] = x_ref[...].astype(jnp.float32)

    w = w_ref[0]                                   # [D_pad, D_pad]
    y = jnp.dot(h_ref[...].astype(w.dtype), w,     # MXU, f32 accumulate
                preferred_element_type=jnp.float32)
    y = y + b_ref[0]                               # [1, D_pad] broadcasts over batch
    # ReLU on every layer except the last (scalar predicate broadcast on the VPU).
    y = jnp.where(l < n_layer - 1, jnp.maximum(y, 0.0), y)
    h_ref[...] = y

    @pl.when(l == n_layer - 1)
    def _():
        o_ref[...] = y.astype(o_ref.dtype)


@functools.partial(jax.jit, static_argnames=("n_layer", "n_action"))
def linear_net_forward(x: jax.Array, w_stack: jax.Array, b_stack: jax.Array,
                       *, n_layer: int, n_action: int) -> jax.Array:
    """Pad to (8,128)-aligned tiles, run one layer-streaming Pallas call, slice back."""
    batch, in_f = x.shape
    _, d_pad, _ = w_stack.shape

    # Batch tile: multiple of 8 (f32 sublane tile).  Use 256-row tiles once the batch
    # is large enough that a "parallel" batch axis can feed both v7x TensorCores
    # (and fill more MXU rows); tiny batches get a single 8-row block.
    tb = 256 if batch >= 512 else _round_up(max(batch, 1), 8)
    b_pad = _round_up(max(batch, 1), tb)
    n_bb = b_pad // tb

    # Zero-pad activations once (exact math: padded W rows/cols and bias are zero;
    # padded batch rows are sliced off below).
    x_pad = jnp.pad(x, ((0, b_pad - batch), (0, d_pad - in_f)))

    # VMEM budget: double-buffered weight block + double-buffered x/out blocks +
    # activation scratch + bias + slack.  Keep this under 64 MiB for v7x; on v5e/v6e
    # it simply lifts the 16/32 MiB default scoped limit as needed.
    w_bytes = 2 * d_pad * d_pad * w_stack.dtype.itemsize
    act_bytes = (2 + 2 + 1) * tb * d_pad * 4
    misc_bytes = 4 * d_pad * b_stack.dtype.itemsize + (2 << 20)
    vmem_limit = int(min(max(w_bytes + act_bytes + misc_bytes, 16 << 20), 128 << 20))

    out_pad = pl.pallas_call(
        functools.partial(_mlp_layer_kernel, n_layer=n_layer),
        out_shape=jax.ShapeDtypeStruct((b_pad, d_pad), x.dtype),
        grid_spec=pltpu.PrefetchScalarGridSpec(
            num_scalar_prefetch=0,
            grid=(n_bb, n_layer),                               # layers iterate fastest
            in_specs=[
                pl.BlockSpec((tb, d_pad), lambda bb, l: (bb, 0)),        # x: per batch block
                pl.BlockSpec((1, d_pad, d_pad), lambda bb, l: (l, 0, 0)),  # W: per layer
                pl.BlockSpec((1, 1, d_pad), lambda bb, l: (l, 0, 0)),      # b: per layer
            ],
            out_specs=pl.BlockSpec((tb, d_pad), lambda bb, l: (bb, 0)),
            scratch_shapes=[pltpu.VMEM((tb, d_pad), jnp.float32)],       # carried h
        ),
        compiler_params=pltpu.CompilerParams(
            dimension_semantics=("parallel", "arbitrary"),
            vmem_limit_bytes=vmem_limit,
        ),
    )(x_pad, w_stack, b_stack)

    return out_pad[:batch, :n_action]


class LinearNetPallas:
    """JAX/Pallas port of the PyTorch LinearNet module (fused single-kernel forward)."""

    def __init__(self, dim_observation: int, n_action: int, hidden_dim: int,
                 n_layer: int, key: jax.Array, param_dtype=jnp.float32):
        assert n_layer > 0
        self.dim_observation = dim_observation
        self.n_action = n_action
        self.hidden_dim = hidden_dim
        self.n_layer = n_layer

        # Layer (in_dim, out_dim) list matching the PyTorch construction.
        if n_layer == 1:
            dims = [(dim_observation, n_action)]
        else:
            dims = [(dim_observation, hidden_dim)]
            dims += [(hidden_dim, hidden_dim)] * (n_layer - 2)
            dims += [(hidden_dim, n_action)]

        # Deterministic init (PyTorch-style uniform(-1/sqrt(fan_in), 1/sqrt(fan_in))).
        # Weights stored as [in, out] so the kernel computes y = x @ W + b on the MXU.
        self.params = []
        for (fan_in, fan_out) in dims:
            key, kw, kb = jax.random.split(key, 3)
            bound = 1.0 / jnp.sqrt(jnp.float32(fan_in))
            w = jax.random.uniform(kw, (fan_in, fan_out), jnp.float32, -bound, bound)
            b = jax.random.uniform(kb, (fan_out,), jnp.float32, -bound, bound)
            self.params.append((w, b))

        # Pad everything ONCE at init to a common lane-dense width (multiple of 128)
        # and stack so the streamed kernel takes exactly two parameter operands.
        all_dims = [dim_observation] + [d for (_, d) in dims]
        self.d_pad = _round_up(max(all_dims), 128)
        w_slabs, b_slabs = [], []
        for (w, b) in self.params:
            fi, fo = w.shape
            w_slabs.append(jnp.pad(w, ((0, self.d_pad - fi), (0, self.d_pad - fo))))
            b_slabs.append(jnp.pad(b, (0, self.d_pad - fo)).reshape(1, self.d_pad))
        # Weights in param_dtype (bf16 halves DMA bytes & is MXU-native); bias kept f32
        # so the bias-add / ReLU epilogue stays full precision.
        self.w_stack = jnp.stack(w_slabs, axis=0).astype(param_dtype)  # [L, D_pad, D_pad]
        self.b_stack = jnp.stack(b_slabs, axis=0)                      # [L, 1, D_pad] f32

    def __call__(self, x: jax.Array) -> jax.Array:
        return linear_net_forward(x, self.w_stack, self.b_stack,
                                  n_layer=self.n_layer, n_action=self.n_action)


if __name__ == "__main__":
    key = jax.random.PRNGKey(0)
    k_params, k_x = jax.random.split(key)

    dim_observation = 16
    n_action = 4
    hidden_dim = 32
    n_layer = 3
    batch = 2

    # param_dtype=jnp.float32 keeps the tight reference tolerance; use jnp.bfloat16
    # for production-size memory-bound speedups (loosen the tolerance accordingly).
    net = LinearNetPallas(dim_observation, n_action, hidden_dim, n_layer, k_params,
                          param_dtype=jnp.float32)
    x = jax.random.normal(k_x, (batch, dim_observation), jnp.float32)

    out = net(x)
    out = jax.block_until_ready(out)

    # Reference check in plain JAX (same math, unpadded params).
    ref = x
    for i, (w, b) in enumerate(net.params):
        ref = ref @ w + b
        if i != len(net.params) - 1:
            ref = jnp.maximum(ref, 0.0)

    assert out.shape == (batch, n_action)
    assert jnp.allclose(out, ref, atol=1e-5, rtol=1e-5)

    print("KERNEL_OK")
</pallas_src>

<mosaic_0001>
module attributes {stable_mosaic.version = 11 : i64} {
  func.func @_mlp_layer_kernel(%arg0: i32, %arg1: i32, %arg2: memref<8x128xf32, #tpu.memory_space<vmem>>, %arg3: memref<1x128x128xf32, #tpu.memory_space<vmem>>, %arg4: memref<1x1x128xf32, #tpu.memory_space<vmem>>, %arg5: memref<8x128xf32, #tpu.memory_space<vmem>>, %arg6: memref<8x128xf32, #tpu.memory_space<vmem>>) attributes {dimension_semantics = [#tpu.dimension_semantics<parallel>, #tpu.dimension_semantics<arbitrary>], iteration_bounds = array<i64: 1, 3>, scalar_prefetch = 0 : i64, scratch_operands = 1 : i64, tpu.core_type = #tpu.core_type<tc>, window_params = [{transform_indices = @transform_0, window_bounds = array<i64: 8, 128>}, {transform_indices = @transform_1, window_bounds = array<i64: 1, 128, 128>}, {transform_indices = @transform_2, window_bounds = array<i64: 1, 1, 128>}, {transform_indices = @transform_3, window_bounds = array<i64: 8, 128>}]} {
    %c0_i32 = arith.constant 0 : i32
    %0 = arith.cmpi eq, %arg1, %c0_i32 : i32
    %1 = arith.extui %0 : i1 to i32
    %c0_i32_0 = arith.constant 0 : i32
    %2 = arith.cmpi ne, %1, %c0_i32_0 : i32
    scf.if %2 {
      %c0_13 = arith.constant 0 : index
      %c0_14 = arith.constant 0 : index
      %19 = vector.load %arg2[%c0_13, %c0_14] : memref<8x128xf32, #tpu.memory_space<vmem>>, vector<8x128xf32>
      %c0_15 = arith.constant 0 : index
      %c0_16 = arith.constant 0 : index
      %20 = vector.load %arg6[%c0_15, %c0_16] : memref<8x128xf32, #tpu.memory_space<vmem>>, vector<8x128xf32>
      tpu.vector_store %arg6[%c0_15, %c0_16], %19 {strides = array<i32>} : memref<8x128xf32, #tpu.memory_space<vmem>>, vector<8x128xf32>,
    } else {
    }
    %c0 = arith.constant 0 : index
    %c0_1 = arith.constant 0 : index
    %c0_2 = arith.constant 0 : index
    %3 = vector.load %arg3[%c0, %c0_1, %c0_2] : memref<1x128x128xf32, #tpu.memory_space<vmem>>, vector<1x128x128xf32>
    %4 = vector.shape_cast %3 : vector<1x128x128xf32> to vector<128x128xf32>
    %c0_3 = arith.constant 0 : index
    %c0_4 = arith.constant 0 : index
    %5 = vector.load %arg6[%c0_3, %c0_4] : memref<8x128xf32, #tpu.memory_space<vmem>>, vector<8x128xf32>
    %cst = arith.constant dense<0.000000e+00> : vector<8x128xf32>
    %6 = tpu.matmul %5, %4, %cst {dimension_numbers = #tpu.dot_dimension_numbers<[1], [0], [0], [1], [0, 0, 1, 1], [], []>} : vector<8x128xf32>, vector<128x128xf32>, vector<8x128xf32> -> vector<8x128xf32>
    %c0_5 = arith.constant 0 : index
    %c0_6 = arith.constant 0 : index
    %c0_7 = arith.constant 0 : index
    %7 = vector.load %arg4[%c0_5, %c0_6, %c0_7] : memref<1x1x128xf32, #tpu.memory_space<vmem>>, vector<1x1x128xf32>
    %8 = vector.shape_cast %7 : vector<1x1x128xf32> to vector<1x128xf32>
    %9 = vector.broadcast %8 : vector<1x128xf32> to vector<8x128xf32>
    %10 = arith.addf %6, %9 : vector<8x128xf32>
    %c2_i32 = arith.constant 2 : i32
    %11 = arith.cmpi slt, %arg1, %c2_i32 : i32
    %cst_8 = arith.constant 0.000000e+00 : f32
    %12 = vector.broadcast %cst_8 : f32 to vector<8x128xf32>
    %13 = arith.maximumf %10, %12 : vector<8x128xf32>
    %14 = arith.select %11, %13, %10 : vector<8x128xf32>
    %c0_9 = arith.constant 0 : index
    %c0_10 = arith.constant 0 : index
    %15 = vector.load %arg6[%c0_9, %c0_10] : memref<8x128xf32, #tpu.memory_space<vmem>>, vector<8x128xf32>
    tpu.vector_store %arg6[%c0_9, %c0_10], %14 {strides = array<i32>} : memref<8x128xf32, #tpu.memory_space<vmem>>, vector<8x128xf32>,
    %c2_i32_11 = arith.constant 2 : i32
    %16 = arith.cmpi eq, %arg1, %c2_i32_11 : i32
    %17 = arith.extui %16 : i1 to i32
    %c0_i32_12 = arith.constant 0 : i32
    %18 = arith.cmpi ne, %17, %c0_i32_12 : i32
    scf.if %18 {
      %c0_13 = arith.constant 0 : index
      %c0_14 = arith.constant 0 : index
      %19 = vector.load %arg5[%c0_13, %c0_14] : memref<8x128xf32, #tpu.memory_space<vmem>>, vector<8x128xf32>
      tpu.vector_store %arg5[%c0_13, %c0_14], %14 {strides = array<i32>} : memref<8x128xf32, #tpu.memory_space<vmem>>, vector<8x128xf32>,
    } else {
    }
    return
  }
  func.func @transform_0(%arg0: i32, %arg1: i32) -> (i32, i32) {
    %c0_i32 = arith.constant 0 : i32
    %c0_i32_0 = arith.constant 0 : i32
    return %arg0, %c0_i32 : i32, i32
  }
  func.func @transform_1(%arg0: i32, %arg1: i32) -> (i32, i32, i32) {
    %c0_i32 = arith.constant 0 : i32
    %c0_i32_0 = arith.constant 0 : i32
    %c0_i32_1 = arith.constant 0 : i32
    return %arg1, %c0_i32, %c0_i32_0 : i32, i32, i32
  }
  func.func @transform_2(%arg0: i32, %arg1: i32) -> (i32, i32, i32) {
    %c0_i32 = arith.constant 0 : i32
    %c0_i32_0 = arith.constant 0 : i32
    %c0_i32_1 = arith.constant 0 : i32
    return %arg1, %c0_i32, %c0_i32_0 : i32, i32, i32
  }
  func.func @transform_3(%arg0: i32, %arg1: i32) -> (i32, i32) {
    %c0_i32 = arith.constant 0 : i32
    %c0_i32_0 = arith.constant 0 : i32
    return %arg0, %c0_i32 : i32, i32
  }
}

</mosaic_0001>

<llo_original>
// kernel: linear_net_forward.1
$region0: #{linear_net_forward.1}
  #allocation0 [shape = 'u32[]', space=smem, size = 0x4, offset = 0x4, fixed_abs, tag = 'smem constant byte address 0x4 - core index']
  #allocation1 [shape = 'u32[144,128]{1,0:T(1,128)}', space=vmem, size = 0x12000, scoped, tag = 'internal scratch']
  #allocation2 [shape = 'f32[8,128]{1,0:T(8,128)}', space=vmem, size = 0x1000, scoped, tag = 'scratch operand']
  %s0 = inlined_call_operand.vmem [shape: f32[8,128], index: 0, kind: input, shape index: {}]
  %s1 = inlined_call_operand.hbm [shape: f32[3,128,128], index: 1, kind: input, shape index: {}]
  %s2 = inlined_call_operand.vmem [shape: f32[3,1,128], index: 2, kind: input, shape index: {}]
  %s3 = inlined_call_operand.vmem [shape: f32[8,128], index: 3, kind: output, shape index: {}]
  %s4 = sld [smem:[#allocation0]]
  $region57: #{linear_net_forward.1} parent=0
    _
  %s6 = ssub.s32 1, %s4
  %s7 = scalar_select 0, %s6, %s4
  $region1: #{linear_net_forward.1} parent=0
    #allocation3 [shape = 'u8[131072]{0}', space=vmem, size = 0x20000, scoped, tag = 'input window, operand 1']
    #allocation4 [shape = 's32[2]{0}', space=sflag, size = 0x8, scoped, tag = 'scoped memory for linear_net_forward.1']
    %8 = vsyncpa [#allocation4], 0
    %s9 = scalar_lea.sflag [#allocation4], 1
    %10 = vsyncpa %s9, 0
    loop: start=0, step=1, limit=5
    $region2: #{linear_net_forward.1} parent=1 // loop_pre_header
      _
    $region3: #{linear_net_forward.1} parent=1 // loop_header
      %s12 = sphi 0, %s16
      %p13 = scmp.ge.s32.totalorder %s12, 5
      %s19 = sphi 0, %s31
      %s20 = sphi 0, %s27
      %s21 = sphi 0, %s19
      %s22 = sphi 0, %s20
      %s23 = sphi 0, %s21
      %s24 = sphi 0, %s22
      %s34 = sphi 0, %s36
      %s37 = sphi 0, %s34
      %s38 = sphi 0, %s37
      %s54 = sphi 0, %s38
      %s60 = sphi 0, %s62
      %s63 = sphi 0, %s60
      %s64 = sphi 0, %s63
      %s80 = sphi 0, %s64
      %s86 = sphi 0, %s88
      %s89 = sphi 0, %s86
      %s90 = sphi 0, %s89
      %s106 = sphi 0, %s90
      %s112 = sphi 0, %s114
      %s115 = sphi 0, %s112
      %s116 = sphi 0, %s115
      %s132 = sphi 0, %s116
    $region4: #{linear_net_forward.1} parent=1 // loop_header_branch
      %15 = sbr.rel (%p13) target = $region8
    $region5: #{linear_net_forward.1} parent=1 // loop_body
      %s17 = ssub.s32 %s12, 1
      %s18 = ssub.s32 %s12, 2
      %s25 = sadd.s32 1, %s20
      %p26 = scmp.ge.s32.totalorder %s25, 3
      %s27 = scalar_select %p26, 0, %s25
      %s28 = sadd.s32 1, %s19
      %s29 = scalar_select %p26, %s28, %s19
      %p30 = scmp.ge.s32.totalorder %s29, 1
      %s31 = scalar_select %p30, 0, %s29
      %s32 = ssub.s32 %s19, %s31
      %p33 = scmp.eq.s32.totalorder %s32, 0
      %s35 = sadd.s32 %s34, 1
      %s36 = scalar_select %p33, %s34, %s35
      %p39 = pneg %p33
      %p40 = scmp.eq.s32.totalorder %s12, 2
      %p41 = por %p39, %p40
      %p42 = scmp.ne.s32.totalorder %s34, %s37
      %p43 = scmp.eq.s32.totalorder %s12, 0
      %p44 = por %p42, %p43
      %p45 = scmp.ne.s32.totalorder %s34, %s37
      %p46 = scmp.eq.s32.totalorder %s17, 2
      %p47 = por %p45, %p46
      %p48 = scmp.ne.s32.totalorder %s37, %s38
      %p49 = scmp.eq.s32.totalorder %s17, 0
      %p50 = por %p48, %p49
      %p51 = scmp.ne.s32.totalorder %s37, %s38
      %p52 = scmp.eq.s32.totalorder %s18, 2
      %p53 = por %p51, %p52
      %p55 = scmp.ne.s32.totalorder %s38, %s54
      %p56 = scmp.eq.s32.totalorder %s18, 0
      %p57 = por %p55, %p56
      %s58 = ssub.s32 %s20, %s27
      %p59 = scmp.eq.s32.totalorder %s58, 0
      %s61 = sadd.s32 %s60, 1
      %s62 = scalar_select %p59, %s60, %s61
      %p65 = pneg %p59
      %p66 = scmp.eq.s32.totalorder %s12, 2
      %p67 = por %p65, %p66
      %p68 = scmp.ne.s32.totalorder %s60, %s63
      %p69 = scmp.eq.s32.totalorder %s12, 0
      %p70 = por %p68, %p69
      %p71 = scmp.ne.s32.totalorder %s60, %s63
      %p72 = scmp.eq.s32.totalorder %s17, 2
      %p73 = por %p71, %p72
      %p74 = scmp.ne.s32.totalorder %s63, %s64
      %p75 = scmp.eq.s32.totalorder %s17, 0
      %p76 = por %p74, %p75
      %p77 = scmp.ne.s32.totalorder %s63, %s64
      %p78 = scmp.eq.s32.totalorder %s18, 2
      %p79 = por %p77, %p78
      %p81 = scmp.ne.s32.totalorder %s64, %s80
      %p82 = scmp.eq.s32.totalorder %s18, 0
      %p83 = por %p81, %p82
      %s84 = ssub.s32 %s20, %s27
      %p85 = scmp.eq.s32.totalorder %s84, 0
      %s87 = sadd.s32 %s86, 1
      %s88 = scalar_select %p85, %s86, %s87
      %p91 = pneg %p85
      %p92 = scmp.eq.s32.totalorder %s12, 2
      %p93 = por %p91, %p92
      %p94 = scmp.ne.s32.totalorder %s86, %s89
      %p95 = scmp.eq.s32.totalorder %s12, 0
      %p96 = por %p94, %p95
      %p97 = scmp.ne.s32.totalorder %s86, %s89
      %p98 = scmp.eq.s32.totalorder %s17, 2
      %p99 = por %p97, %p98
      %p100 = scmp.ne.s32.totalorder %s89, %s90
      %p101 = scmp.eq.s32.totalorder %s17, 0
      %p102 = por %p100, %p101
      %p103 = scmp.ne.s32.totalorder %s89, %s90
      %p104 = scmp.eq.s32.totalorder %s18, 2
      %p105 = por %p103, %p104
      %p107 = scmp.ne.s32.totalorder %s90, %s106
      %p108 = scmp.eq.s32.totalorder %s18, 0
      %p109 = por %p107, %p108
      %s110 = ssub.s32 %s19, %s31
      %p111 = scmp.eq.s32.totalorder %s110, 0
      %s113 = sadd.s32 %s112, 1
      %s114 = scalar_select %p111, %s112, %s113
      %p117 = pneg %p111
      %p118 = scmp.eq.s32.totalorder %s12, 2
      %p119 = por %p117, %p118
      %p120 = scmp.ne.s32.totalorder %s112, %s115
      %p121 = scmp.eq.s32.totalorder %s12, 0
      %p122 = por %p120, %p121
      %p123 = scmp.ne.s32.totalorder %s112, %s115
      %p124 = scmp.eq.s32.totalorder %s17, 2
      %p125 = por %p123, %p124
      %p126 = scmp.ne.s32.totalorder %s115, %s116
      %p127 = scmp.eq.s32.totalorder %s17, 0
      %p128 = por %p126, %p127
      %p129 = scmp.ne.s32.totalorder %s115, %s116
      %p130 = scmp.eq.s32.totalorder %s18, 2
      %p131 = por %p129, %p130
      %p133 = scmp.ne.s32.totalorder %s116, %s132
      %p134 = scmp.eq.s32.totalorder %s18, 0
      %p135 = por %p133, %p134
      %p136 = scmp.le.s32.totalorder 1, %s12
      %p137 = scmp.lt.s32.totalorder %s12, 4
      %p138 = pnand %p136, %p137
      %p139 = pneg %p138
      // Predicated region
      $region9: #{linear_net_forward.1} parent=5 // pred_check
        _
      $region10: #{linear_net_forward.1} parent=5 // pred_check_branch
        %141 = sbr.rel (%p138) target = $region12
      $region11: #{linear_net_forward.1} parent=5 // pred_region
        %s142 = ssub.s32 %s12, 1
        // Predicated region
        $region13: #{linear_net_forward.1} parent=11 // pred_check
          %p143 = pneg %p50
        $region14: #{linear_net_forward.1} parent=11 // pred_check_branch
          %145 = sbr.rel (%p143) target = $region16
        $region15: #{linear_net_forward.1} parent=11 // pred_region
          %p146 = scmp.lt.s32.totalorder %s21, 0
          %s147 = scalar_select %p146, %s21, 0
          %s148 = smul.addr %s147, 8
          %s149 = scalar_lea.vmem %s0, %s148
        $region16: #{linear_net_forward.1} parent=11 // pred_fallthru
          _
      $region12: #{linear_net_forward.1} parent=5 // pred_fallthru
        _
      %p150 = scmp.lt.s32.totalorder %s12, 3
      // Predicated region
      $region17: #{linear_net_forward.1} parent=5 // pred_check
        %p151 = pneg %p150
      $region18: #{linear_net_forward.1} parent=5 // pred_check_branch
        %153 = sbr.rel (%p151) target = $region20
      $region19: #{linear_net_forward.1} parent=5 // pred_region
        // Predicated region
        $region21: #{linear_net_forward.1} parent=19 // pred_check
          %p154 = pneg %p70
        $region22: #{linear_net_forward.1} parent=19 // pred_check_branch
          %156 = sbr.rel (%p154) target = $region24
        $region23: #{linear_net_forward.1} parent=19 // pred_region
          %s157 = sand.u32 %s60, 1
          %s158 = scalar_lea.sflag [#allocation4], %s157
          %s159 = sand.u32 %s60, 1
          %s160 = smul.addr %s159, 128
          %s161 = scalar_lea.vmem [#allocation3], %s160
          %s163 = ssub.s32 2048, 2048
          %164 = vsyncadd %s158, %s163
          %s165 = smul.addr %s20, 16
          %s166 = smul.addr %s165, 128
          %s167 = scalar_lea.hbm %s1, %s166
          %s168 = sshll.u32 %s161, 4
          %s169 = int_to_ptr.vmem [resolvable:$true] %s168
          %174 = dma.hbm_to_vmem [thread:$0]  %s167, 2048, %s169, %s158, 128, 128, 8
        $region24: #{linear_net_forward.1} parent=19 // pred_fallthru
          _
        // Predicated region
        $region25: #{linear_net_forward.1} parent=19 // pred_check
          %p175 = pneg %p96
        $region26: #{linear_net_forward.1} parent=19 // pred_check_branch
          %177 = sbr.rel (%p175) target = $region28
        $region27: #{linear_net_forward.1} parent=19 // pred_region
          %p178 = scmp.lt.s32.totalorder %s20, 2
          %s179 = scalar_select %p178, %s20, 2
          %s180 = scalar_lea.vmem %s2, %s179
        $region28: #{linear_net_forward.1} parent=19 // pred_fallthru
          _
      $region20: #{linear_net_forward.1} parent=5 // pred_fallthru
        _
      %p181 = scmp.le.s32.totalorder 1, %s12
      %p182 = scmp.lt.s32.totalorder %s12, 4
      %p183 = pnand %p181, %p182
      %p184 = pneg %p183
      // Predicated region
      $region29: #{linear_net_forward.1} parent=5 // pred_check
        _
      $region30: #{linear_net_forward.1} parent=5 // pred_check_branch
        %186 = sbr.rel (%p183) target = $region32
      $region31: #{linear_net_forward.1} parent=5 // pred_region
        %s187 = ssub.s32 %s12, 1
        %s188 = sand.u32 %s63, 1
        %s189 = scalar_lea.sflag [#allocation4], %s188
        %s190 = sand.u32 %s63, 1
        %s191 = smul.addr %s190, 128
        %s192 = scalar_lea.vmem [#allocation3], %s191
        // Predicated region
        $region33: #{linear_net_forward.1} parent=31 // pred_check
          %p193 = pneg %p76
        $region34: #{linear_net_forward.1} parent=31 // pred_check_branch
          %195 = sbr.rel (%p193) target = $region36
        $region35: #{linear_net_forward.1} parent=31 // pred_region
          %196 = dma.done %s189, 2048
        $region36: #{linear_net_forward.1} parent=31 // pred_fallthru
          _
        %p197 = scmp.lt.s32.totalorder %s21, 0
        %s198 = scalar_select %p197, %s21, 0
        %s199 = smul.addr %s198, 8
        %s200 = scalar_lea.vmem %s0, %s199
        %p201 = pneg %p50
        %p202 = pneg %p47
        %s203 = sand.u32 %s63, 1
        %s204 = scalar_lea.sflag [#allocation4], %s203
        %s205 = sand.u32 %s63, 1
        %s206 = smul.addr %s205, 128
        %s207 = scalar_lea.vmem [#allocation3], %s206
        %p208 = pneg %p76
        %p209 = pneg %p73
        %p210 = scmp.lt.s32.totalorder %s22, 2
        %s211 = scalar_select %p210, %s22, 2
        %s212 = scalar_lea.vmem %s2, %s211
        %p213 = pneg %p102
        %p214 = pneg %p99
        %p215 = pneg %p128
        %p216 = pneg %p125
        %p217 = scmp.lt.s32.totalorder %s21, 0
        %s218 = scalar_select %p217, %s21, 0
        %s219 = smul.addr %s218, 8
        %s220 = scalar_lea.vmem %s3, %s219
        %p221 = scmp.lt.s32.totalorder %s21, 0
        %s222 = scalar_select %p221, %s21, 0
        %s223 = smul.addr %s222, 8
        %s224 = scalar_lea.vmem %s0, %s223
        %p225 = scmp.lt.s32.totalorder %s22, 2
        %s226 = scalar_select %p225, %s22, 2
        %s227 = scalar_lea.vmem %s2, %s226
        %p228 = scmp.lt.s32.totalorder %s21, 0
        %s229 = scalar_select %p228, %s21, 0
        %s230 = smul.addr %s229, 8
        %s231 = scalar_lea.vmem %s3, %s230
        %p232 = scmp.eq.s32.totalorder %s22, 0
        // Predicated region
        $region37: #{linear_net_forward.1} parent=31 // pred_check
          %p233 = pneg %p232
        $region38: #{linear_net_forward.1} parent=31 // pred_check_branch
          %235 = sbr.rel (%p233) target = $region40
        $region39: #{linear_net_forward.1} parent=31 // pred_region
          %v236 = vld [vmem:[%s224] sm:$0xff]
          %237 = vst [vmem:[#allocation2] sm:$0xff] %v236
        $region40: #{linear_net_forward.1} parent=31 // pred_fallthru
          _
        %v238 = vld [vmem:[%s192] sm:$0xff]
        %v239 = vld [vmem:[%s192 + $0x8] sm:$0xff]
        %v240 = vld [vmem:[%s192 + $0x10] sm:$0xff]
        %v241 = vld [vmem:[%s192 + $0x18] sm:$0xff]
        %v242 = vld [vmem:[%s192 + $0x20] sm:$0xff]
        %v243 = vld [vmem:[%s192 + $0x28] sm:$0xff]
        %v244 = vld [vmem:[%s192 + $0x30] sm:$0xff]
        %v245 = vld [vmem:[%s192 + $0x38] sm:$0xff]
        %v246 = vld [vmem:[%s192 + $0x40] sm:$0xff]
        %v247 = vld [vmem:[%s192 + $0x48] sm:$0xff]
        %v248 = vld [vmem:[%s192 + $0x50] sm:$0xff]
        %v249 = vld [vmem:[%s192 + $0x58] sm:$0xff]
        %v250 = vld [vmem:[%s192 + $0x60] sm:$0xff]
        %v251 = vld [vmem:[%s192 + $0x68] sm:$0xff]
        %v252 = vld [vmem:[%s192 + $0x70] sm:$0xff]
        %v253 = vld [vmem:[%s192 + $0x78] sm:$0xff]
        %v254 = vld [vmem:[#allocation2] sm:$0xff]
        %v255 = vld [vmem:[%s227] sm:$0x1]
        %v257 = vlaneseq
        %v258 = vshrl.u32 %v257, 7
        %v259 = vsub.s32 0, %v258
        %v260 = vrot.slane %v255, %v259
        %262 = vmatprep.subr.mxu0 0.0
        %263 = vmatpush1.msra.mxu0 %v253
        %264 = vmatprep.subr.mxu0 0.0
        %265 = vmatpush1.msra.mxu0 %v252
        %266 = vmatprep.subr.mxu0 0.0
        %267 = vmatpush1.msra.mxu0 %v251
        %268 = vmatprep.subr.mxu0 0.0
        %269 = vmatpush1.msra.mxu0 %v250
        %270 = vmatprep.subr.mxu0 0.0
        %271 = vmatpush1.msra.mxu0 %v249
        %272 = vmatprep.subr.mxu0 0.0
        %273 = vmatpush1.msra.mxu0 %v248
        %274 = vmatprep.subr.mxu0 0.0
        %275 = vmatpush1.msra.mxu0 %v247
        %276 = vmatprep.subr.mxu0 0.0
        %277 = vmatpush1.msra.mxu0 %v246
        %278 = vmatprep.subr.mxu0 0.0
        %279 = vmatpush1.msra.mxu0 %v245
        %280 = vmatprep.subr.mxu0 0.0
        %281 = vmatpush1.msra.mxu0 %v244
        %282 = vmatprep.subr.mxu0 0.0
        %283 = vmatpush1.msra.mxu0 %v243
        %284 = vmatprep.subr.mxu0 0.0
        %285 = vmatpush1.msra.mxu0 %v242
        %286 = vmatprep.subr.mxu0 0.0
        %287 = vmatpush1.msra.mxu0 %v241
        %288 = vmatprep.subr.mxu0 0.0
        %289 = vmatpush1.msra.mxu0 %v240
        %290 = vmatprep.subr.mxu0 0.0
        %291 = vmatpush1.msra.mxu0 %v239
        %292 = vmatprep.subr.mxu0 0.0
        %293 = vmatpush1.msra.mxu0 %v238
        %294 = vmatprep.subr.mxu0 0.0
        %295 = vmatpush2.msra.mxu0 0.0
        %296 = vmatprep.subr.mxu0 0.0
        %297 = vmatpush2.msra.mxu0 0.0
        %298 = vmatprep.subr.mxu0 0.0
        %299 = vmatpush2.msra.mxu0 0.0
        %300 = vmatprep.subr.mxu0 0.0
        %301 = vmatpush2.msra.mxu0 0.0
        %302 = vmatprep.subr.mxu0 0.0
        %303 = vmatpush2.msra.mxu0 0.0
        %304 = vmatprep.subr.mxu0 0.0
        %305 = vmatpush2.msra.mxu0 0.0
        %306 = vmatprep.subr.mxu0 0.0
        %307 = vmatpush2.msra.mxu0 0.0
        %308 = vmatprep.subr.mxu0 0.0
        %309 = vmatpush2.msra.mxu0 0.0
        %310 = vmatprep.subr.mxu0 0.0
        %311 = vmatpush2.msra.mxu0 0.0
        %312 = vmatprep.subr.mxu0 0.0
        %313 = vmatpush2.msra.mxu0 0.0
        %314 = vmatprep.subr.mxu0 0.0
        %315 = vmatpush2.msra.mxu0 0.0
        %316 = vmatprep.subr.mxu0 0.0
        %317 = vmatpush2.msra.mxu0 0.0
        %318 = vmatprep.subr.mxu0 0.0
        %319 = vmatpush2.msra.mxu0 0.0
        %320 = vmatprep.subr.mxu0 0.0
        %321 = vmatpush2.msra.mxu0 0.0
        %322 = vmatprep.subr.mxu0 0.0
        %323 = vmatpush2.msra.mxu0 0.0
        %324 = vmatprep.subr.mxu0 0.0
        %325 = vmatpush2.msra.mxu0 0.0
        %326 = vmatprep.mubr.f32.mxu0 0.0
        %327 = vmatmul.mubr.f32.gmra.mxu0 %v254
        %v328 = vpop.f32.mrf.mxu0
        %v329 = vadd.f32 %v260, %v328
        %v330 = vpop.f32.mrf.mxu0
        %331 = vdwg.mxu0
        %p332 = scmp.lt.s32.totalorder %s22, 2
        %v333 = vmax.f32 %v329, 0.0
        %s334 = scalar_select %p332, 1, 0
        %v335 = vstv %s334
        %vm336 = vcmp.eq.s32.totalorder %v335, 1
        %v337 = vsel %vm336, %v333, %v329
        %338 = vst [vmem:[#allocation2] sm:$0xff] %v337
        %p339 = scmp.eq.s32.totalorder %s22, 2
        // Predicated region
        $region41: #{linear_net_forward.1} parent=31 // pred_check
          %p340 = pneg %p339
        $region42: #{linear_net_forward.1} parent=31 // pred_check_branch
          %342 = sbr.rel (%p340) target = $region44
        $region43: #{linear_net_forward.1} parent=31 // pred_region
          %343 = vst [vmem:[%s231] sm:$0xff] %v337
        $region44: #{linear_net_forward.1} parent=31 // pred_fallthru
          _
        %p344 = scmp.lt.s32.totalorder %s21, 0
        %s345 = scalar_select %p344, %s21, 0
        %s346 = smul.addr %s345, 8
        %s347 = scalar_lea.vmem %s3, %s346
        // Predicated region
        $region45: #{linear_net_forward.1} parent=31 // pred_check
          %p348 = pneg %p125
        $region46: #{linear_net_forward.1} parent=31 // pred_check_branch
          %350 = sbr.rel (%p348) target = $region48
        $region47: #{linear_net_forward.1} parent=31 // pred_region
          _
        $region48: #{linear_net_forward.1} parent=31 // pred_fallthru
          _
        // Predicated region
        $region49: #{linear_net_forward.1} parent=31 // pred_check
          %p351 = pneg %p125
        $region50: #{linear_net_forward.1} parent=31 // pred_check_branch
          %353 = sbr.rel (%p351) target = $region52
        $region51: #{linear_net_forward.1} parent=31 // pred_region
          %p354 = scmp.lt.s32.totalorder %s21, 0
          %s355 = scalar_select %p354, %s21, 0
          %s356 = smul.addr %s355, 8
          %s357 = scalar_lea.vmem %s3, %s356
        $region52: #{linear_net_forward.1} parent=31 // pred_fallthru
          _
      $region32: #{linear_net_forward.1} parent=5 // pred_fallthru
        _
      %p358 = scmp.le.s32.totalorder 2, %s12
      // Predicated region
      $region53: #{linear_net_forward.1} parent=5 // pred_check
        %p359 = pneg %p358
      $region54: #{linear_net_forward.1} parent=5 // pred_check_branch
        %361 = sbr.rel (%p359) target = $region56
      $region55: #{linear_net_forward.1} parent=5 // pred_region
        %s362 = ssub.s32 %s12, 2
      $region56: #{linear_net_forward.1} parent=5 // pred_fallthru
        _
    $region6: #{linear_net_forward.1} parent=1 // loop_footer
      %s16 = sadd.s32 1, %s12
    $region7: #{linear_net_forward.1} parent=1 // loop_footer_branch
      %11 = sbr.rel target = $region3
    $region8: #{linear_net_forward.1} parent=1 // loop_exit
      _
    %363 = vsyncpa [#allocation4], 1
    %s364 = scalar_lea.sflag [#allocation4], 1
    %365 = vsyncpa %s364, 1

</llo_original>
